<compile_context>
chip_gen: v7x
topology: tpu7x:2x2x1
jax: 0.10.0
libtpu: 0.0.40
codegen_flags: <defaults>
</compile_context>

<pallas_src>
import numpy as np
import jax
import jax.numpy as jnp
from jax import lax
from jax.experimental import pallas as pl
from jax.experimental.pallas import tpu as pltpu

LANE = 128
ROW = 32                      # sublane granularity, packing-safe for f32 / bf16 / int8 tiles
VMEM_BUF_BYTES = 3 * 1024 * 1024


def _weighted_sum_kernel(x_ref, o_ref):
    # x_ref: (TM, D) input tile in its original dtype; reduction axis D on lanes.
    # o_ref: (TM, 1) float32 weighted sum over D (keepdim).
    D = x_ref.shape[-1]
    step = (1.0 / (D - 1)) if D > 1 else 0.0
    # torch.linspace(1, 0, D)[j] == 1 - j/(D-1); built in-kernel, no weight operand.
    j = lax.broadcasted_iota(jnp.int32, (1, D), 1).astype(jnp.float32)
    w = 1.0 - j * jnp.float32(step)
    x = x_ref[...].astype(jnp.float32)          # upcast in VMEM, not in HBM
    # TODO(synk): if a bundle dump ever shows vld/vst spill traffic for very large D,
    # restructure as a chunked fori_loop FMA into a (TM, 1) accumulator.
    o_ref[...] = jnp.sum(x * w, axis=-1, keepdims=True)


def _choose_tm(M, D):
    """Pick the sublane tile for the (M, D) -> (M, 1) weighted reduction."""
    if M <= ROW:
        return M                                 # single block spanning the full row dim
    # Conservative per-buffer VMEM estimate: the D lanes of a (TM, D) tile pad to a
    # multiple of 128 in VMEM, and we budget 4 B/elem so the in-kernel f32 upcast is
    # covered too.  ~3 MiB/buffer => ~6 MiB double-buffered (+ tiny output buffers),
    # comfortably under v5e's 16 MiB scoped-VMEM default and v7x's 32 MiB.
    padded_row_bytes = pl.cdiv(D, LANE) * LANE * 4
    tm_cap = max(ROW, (VMEM_BUF_BYTES // padded_row_bytes) // ROW * ROW)
    # Keep >= 8 grid steps when M allows it: gives the pipeline real DMA/compute overlap
    # and lets the "parallel" axis shard across both TensorCores on v7x.
    tm_split = max(ROW, pl.cdiv(pl.cdiv(M, 8), ROW) * ROW)
    return min(tm_cap, tm_split)


def _weighted_sum_2d(x2d):
    """x2d: (M, D) in its original dtype -> (M, 1) float32 weighted sum along D."""
    M, D = int(x2d.shape[0]), int(x2d.shape[1])
    tm = _choose_tm(M, D)
    grid = (pl.cdiv(M, tm),)                     # ragged last block handled by masking
    return pl.pallas_call(
        _weighted_sum_kernel,
        out_shape=jax.ShapeDtypeStruct((M, 1), jnp.float32),
        grid=grid,
        in_specs=[pl.BlockSpec((tm, D), lambda i: (i, 0))],
        out_specs=pl.BlockSpec((tm, 1), lambda i: (i, 0)),
        compiler_params=pltpu.CompilerParams(
            dimension_semantics=("parallel",),   # megacore sharding on v7x
            vmem_limit_bytes=32 * 1024 * 1024),
    )(x2d)


class SumAvgWeighted3d2dPallas:
    """Pallas TPU port of SumAvgWeighted3d2d (weighted sum-projection along `dim`)."""

    def __init__(self, dim=-1):
        self.dim = dim
        self.microscopy_regime = "sum_projection_avg_weighted"

    def __call__(self, x):
        x = jnp.asarray(x)
        nd = x.ndim
        dim = self.dim % nd
        # TODO(synk): for dim != -1 the torch module broadcasts the linspace weight
        # against the LAST axis (only coherent when dim == -1, its default); we apply
        # the weight along `dim` itself, identical for the default dim=-1 case.
        xm = jnp.moveaxis(x, dim, -1)            # no-op for the default dim=-1
        lead = xm.shape[:-1]
        D = int(xm.shape[-1])
        M = int(np.prod(lead)) if lead else 1
        flat = xm.reshape(M, D)                  # contiguous merge: no data movement
        out = _weighted_sum_2d(flat)             # (M, 1) float32
        out = out.reshape(lead + (1,))
        return jnp.moveaxis(out, -1, dim)        # keepdim at `dim`


if __name__ == "__main__":
    key = jax.random.PRNGKey(0)
    B, X, Y, Z = 2, 16, 16, 8
    x = jax.random.uniform(key, (B, X, Y, Z), dtype=jnp.float32)

    model = SumAvgWeighted3d2dPallas(dim=-1)

    # batched 4-D path
    out = jax.block_until_ready(model(x))
    assert out.shape == (B, X, Y, 1), out.shape

    # pure-JAX reference of the same forward
    w = jnp.linspace(1.0, 0.0, Z, dtype=jnp.float32)
    ref = jnp.sum(x * w, axis=-1, keepdims=True)
    np.testing.assert_allclose(np.asarray(out), np.asarray(ref), rtol=1e-5, atol=1e-6)

    # unbatched 3-D object path
    out3 = jax.block_until_ready(model(x[0]))
    assert out3.shape == (X, Y, 1), out3.shape
    np.testing.assert_allclose(np.asarray(out3), np.asarray(ref[0]),
                               rtol=1e-5, atol=1e-6)

    # bf16 input path: upcast now happens inside the kernel, not in HBM
    xb = x.astype(jnp.bfloat16)
    outb = jax.block_until_ready(model(xb))
    refb = jnp.sum(xb.astype(jnp.float32) * w, axis=-1, keepdims=True)
    np.testing.assert_allclose(np.asarray(outb), np.asarray(refb),
                               rtol=1e-4, atol=1e-4)

    print("KERNEL_OK")
</pallas_src>

<mosaic_0001>
module attributes {stable_mosaic.version = 11 : i64} {
  func.func @_weighted_sum_kernel(%arg0: i32, %arg1: memref<64x8xf32, #tpu.memory_space<vmem>>, %arg2: memref<64x1xf32, #tpu.memory_space<vmem>>) attributes {dimension_semantics = [#tpu.dimension_semantics<parallel>], iteration_bounds = array<i64: 8>, scalar_prefetch = 0 : i64, scratch_operands = 0 : i64, tpu.core_type = #tpu.core_type<tc>, window_params = [{transform_indices = @transform_0, window_bounds = array<i64: 64, 8>}, {transform_indices = @transform_1, window_bounds = array<i64: 64, 1>}]} {
    %0 = tpu.iota {dimensions = array<i32: 1>} : vector<1x8xi32>
    %1 = arith.sitofp %0 : vector<1x8xi32> to vector<1x8xf32>
    %cst = arith.constant 0.142857149 : f32
    %2 = vector.broadcast %cst : f32 to vector<1x8xf32>
    %3 = arith.mulf %1, %2 : vector<1x8xf32>
    %cst_0 = arith.constant 1.000000e+00 : f32
    %4 = vector.broadcast %cst_0 : f32 to vector<1x8xf32>
    %5 = arith.subf %4, %3 : vector<1x8xf32>
    %c0 = arith.constant 0 : index
    %c0_1 = arith.constant 0 : index
    %6 = vector.load %arg1[%c0, %c0_1] : memref<64x8xf32, #tpu.memory_space<vmem>>, vector<64x8xf32>
    %7 = vector.broadcast %5 : vector<1x8xf32> to vector<64x8xf32>
    %8 = arith.mulf %6, %7 : vector<64x8xf32>
    %cst_2 = arith.constant dense<0.000000e+00> : vector<64xf32>
    %9 = vector.multi_reduction <add>, %8, %cst_2 [1] : vector<64x8xf32> to vector<64xf32>
    %10 = vector.shape_cast %9 : vector<64xf32> to vector<64x1xf32>
    %c0_3 = arith.constant 0 : index
    %c0_4 = arith.constant 0 : index
    %11 = vector.load %arg2[%c0_3, %c0_4] : memref<64x1xf32, #tpu.memory_space<vmem>>, vector<64x1xf32>
    tpu.vector_store %arg2[%c0_3, %c0_4], %10 {strides = array<i32>} : memref<64x1xf32, #tpu.memory_space<vmem>>, vector<64x1xf32>,
    return
  }
  func.func @transform_0(%arg0: i32) -> (i32, i32) {
    %c0_i32 = arith.constant 0 : i32
    %c0_i32_0 = arith.constant 0 : i32
    return %arg0, %c0_i32 : i32, i32
  }
  func.func @transform_1(%arg0: i32) -> (i32, i32) {
    %c0_i32 = arith.constant 0 : i32
    %c0_i32_0 = arith.constant 0 : i32
    return %arg0, %c0_i32 : i32, i32
  }
}

</mosaic_0001>

<llo_original>
// kernel: tpu_custom_call.1
$region0: #{tpu_custom_call.1}
  #allocation0 [shape = 'u32[]', space=smem, size = 0x4, offset = 0x4, fixed_abs, tag = 'smem constant byte address 0x4 - core index']
  #allocation1 [shape = 'u32[144,128]{1,0:T(1,128)}', space=vmem, size = 0x12000, scoped, tag = 'internal scratch']
  %s0 = inlined_call_operand.vmem [shape: f32[512,8], index: 0, kind: input, shape index: {}]
  %s1 = inlined_call_operand.vmem [shape: f32[512,1], index: 1, kind: output, shape index: {}]
  %s2 = sld [smem:[#allocation0]]
  $region37: #{tpu_custom_call.1} parent=0
    _
  %s4 = ssub.s32 1, %s2
  %s5 = scalar_select 0, %s4, %s2
  loop: start=0, step=1, limit=10
  $region2: #{tpu_custom_call.1} parent=0 // loop_pre_header
    _
  $region3: #{tpu_custom_call.1} parent=0 // loop_header
    %s7 = sphi 0, %s11
    %p8 = scmp.ge.s32.totalorder %s7, 10
    %s17 = sphi 0, %s19
    %s20 = sphi 0, %s17
    %s21 = sphi 0, %s20
    %s37 = sphi 0, %s21
    %s43 = sphi 0, %s45
    %s46 = sphi 0, %s43
    %s47 = sphi 0, %s46
    %s63 = sphi 0, %s47
  $region4: #{tpu_custom_call.1} parent=0 // loop_header_branch
    %10 = sbr.rel (%p8) target = $region8
  $region5: #{tpu_custom_call.1} parent=0 // loop_body
    %s12 = ssub.s32 %s7, 1
    %s13 = ssub.s32 %s7, 2
    %s14 = sadd.s32 %s7, 1
    %s15 = ssub.s32 %s7, %s14
    %p16 = scmp.eq.s32.totalorder %s15, 0
    %s18 = sadd.s32 %s17, 1
    %s19 = scalar_select %p16, %s17, %s18
    %p22 = pneg %p16
    %p23 = scmp.eq.s32.totalorder %s7, 7
    %p24 = por %p22, %p23
    %p25 = scmp.ne.s32.totalorder %s17, %s20
    %p26 = scmp.eq.s32.totalorder %s7, 0
    %p27 = por %p25, %p26
    %p28 = scmp.ne.s32.totalorder %s17, %s20
    %p29 = scmp.eq.s32.totalorder %s12, 7
    %p30 = por %p28, %p29
    %p31 = scmp.ne.s32.totalorder %s20, %s21
    %p32 = scmp.eq.s32.totalorder %s12, 0
    %p33 = por %p31, %p32
    %p34 = scmp.ne.s32.totalorder %s20, %s21
    %p35 = scmp.eq.s32.totalorder %s13, 7
    %p36 = por %p34, %p35
    %p38 = scmp.ne.s32.totalorder %s21, %s37
    %p39 = scmp.eq.s32.totalorder %s13, 0
    %p40 = por %p38, %p39
    %s41 = ssub.s32 %s7, %s14
    %p42 = scmp.eq.s32.totalorder %s41, 0
    %s44 = sadd.s32 %s43, 1
    %s45 = scalar_select %p42, %s43, %s44
    %p48 = pneg %p42
    %p49 = scmp.eq.s32.totalorder %s7, 7
    %p50 = por %p48, %p49
    %p51 = scmp.ne.s32.totalorder %s43, %s46
    %p52 = scmp.eq.s32.totalorder %s7, 0
    %p53 = por %p51, %p52
    %p54 = scmp.ne.s32.totalorder %s43, %s46
    %p55 = scmp.eq.s32.totalorder %s12, 7
    %p56 = por %p54, %p55
    %p57 = scmp.ne.s32.totalorder %s46, %s47
    %p58 = scmp.eq.s32.totalorder %s12, 0
    %p59 = por %p57, %p58
    %p60 = scmp.ne.s32.totalorder %s46, %s47
    %p61 = scmp.eq.s32.totalorder %s13, 7
    %p62 = por %p60, %p61
    %p64 = scmp.ne.s32.totalorder %s47, %s63
    %p65 = scmp.eq.s32.totalorder %s13, 0
    %p66 = por %p64, %p65
    %p67 = scmp.le.s32.totalorder 1, %s7
    %p68 = scmp.lt.s32.totalorder %s7, 9
    %p69 = pnand %p67, %p68
    %p70 = pneg %p69
    // Predicated region
    $region9: #{tpu_custom_call.1} parent=5 // pred_check
      _
    $region10: #{tpu_custom_call.1} parent=5 // pred_check_branch
      %72 = sbr.rel (%p69) target = $region12
    $region11: #{tpu_custom_call.1} parent=5 // pred_region
      %s73 = ssub.s32 %s7, 1
    $region12: #{tpu_custom_call.1} parent=5 // pred_fallthru
      _
    %p74 = scmp.lt.s32.totalorder %s7, 8
    // Predicated region
    $region13: #{tpu_custom_call.1} parent=5 // pred_check
      %p75 = pneg %p74
    $region14: #{tpu_custom_call.1} parent=5 // pred_check_branch
      %77 = sbr.rel (%p75) target = $region16
    $region15: #{tpu_custom_call.1} parent=5 // pred_region
      // Predicated region
      $region17: #{tpu_custom_call.1} parent=15 // pred_check
        %p78 = pneg %p27
      $region18: #{tpu_custom_call.1} parent=15 // pred_check_branch
        %80 = sbr.rel (%p78) target = $region20
      $region19: #{tpu_custom_call.1} parent=15 // pred_region
        %s81 = smul.u32 8, %s7
        %p82 = scmp.lt.s32.totalorder %s81, 63
        %s83 = scalar_select %p82, %s81, 63
        %s84 = smul.addr %s83, 8
        %s85 = scalar_lea.vmem %s0, %s84
        %s86 = smul.u32 8, %s7
      $region20: #{tpu_custom_call.1} parent=15 // pred_fallthru
        _
    $region16: #{tpu_custom_call.1} parent=5 // pred_fallthru
      _
    %p87 = scmp.le.s32.totalorder 1, %s7
    %p88 = scmp.lt.s32.totalorder %s7, 9
    %p89 = pnand %p87, %p88
    %p90 = pneg %p89
    // Predicated region
    $region21: #{tpu_custom_call.1} parent=5 // pred_check
      _
    $region22: #{tpu_custom_call.1} parent=5 // pred_check_branch
      %92 = sbr.rel (%p89) target = $region24
    $region23: #{tpu_custom_call.1} parent=5 // pred_region
      %s93 = ssub.s32 %s7, 1
      %s94 = smul.u32 8, %s12
      %p95 = scmp.lt.s32.totalorder %s94, 63
      %s96 = scalar_select %p95, %s94, 63
      %s97 = smul.addr %s96, 8
      %s98 = scalar_lea.vmem %s0, %s97
      %p99 = pneg %p33
      %p100 = pneg %p30
      %p101 = pneg %p59
      %p102 = pneg %p56
      %s103 = smul.u32 8, %s12
      %p104 = scmp.lt.s32.totalorder %s103, 63
      %s105 = scalar_select %p104, %s103, 63
      %s106 = smul.addr %s105, 8
      %s107 = scalar_lea.vmem %s1, %s106
      %s108 = smul.u32 8, %s12
      %p109 = scmp.lt.s32.totalorder %s108, 63
      %s110 = scalar_select %p109, %s108, 63
      %s111 = smul.addr %s110, 8
      %s112 = scalar_lea.vmem %s0, %s111
      %s113 = smul.u32 8, %s12
      %s114 = smul.u32 8, %s12
      %p115 = scmp.lt.s32.totalorder %s114, 63
      %s116 = scalar_select %p115, %s114, 63
      %s117 = smul.addr %s116, 8
      %s118 = scalar_lea.vmem %s1, %s117
      %s119 = smul.u32 8, %s12
      %v120 = vlaneseq
      %v121 = vand.u32 %v120, 127
      %v122 = vcvt.s32.f32 %v121
      %v123 = vmul.f32 %v122, 0.14285715
      %v124 = vsub.f32 1.0, %v123
      %v125 = vld [vmem:[%s112] sm:$0xff]
      %v126 = vld [vmem:[%s112 + $0x8] sm:$0xff]
      %v127 = vld [vmem:[%s112 + $0x10] sm:$0xff]
      %v128 = vld [vmem:[%s112 + $0x18] sm:$0xff]
      %v129 = vld [vmem:[%s112 + $0x20] sm:$0xff]
      %v130 = vld [vmem:[%s112 + $0x28] sm:$0xff]
      %v131 = vld [vmem:[%s112 + $0x30] sm:$0xff]
      %v132 = vld [vmem:[%s112 + $0x38] sm:$0xff]
      %v133 = vmul.f32 %v125, %v124
      %v134 = vmul.f32 %v126, %v124
      %v135 = vmul.f32 %v127, %v124
      %v136 = vmul.f32 %v128, %v124
      %v137 = vmul.f32 %v129, %v124
      %v138 = vmul.f32 %v130, %v124
      %v139 = vmul.f32 %v131, %v124
      %v140 = vmul.f32 %v132, %v124
      %vm141 = vcmask 64512
      %v142 = vsel %vm141, %v133, 0.0
      %143 = vadd.xlane.f32.xlu0 %v142
      %v144 = vpop.xlane.xlu0 %143
      %v145 = vsel %vm141, %v134, 0.0
      %146 = vadd.xlane.f32.xlu0 %v145
      %v147 = vpop.xlane.xlu0 %146
      %v148 = vsel %vm141, %v135, 0.0
      %149 = vadd.xlane.f32.xlu0 %v148
      %v150 = vpop.xlane.xlu0 %149
      %v151 = vsel %vm141, %v136, 0.0
      %152 = vadd.xlane.f32.xlu0 %v151
      %v153 = vpop.xlane.xlu0 %152
      %v154 = vsel %vm141, %v137, 0.0
      %155 = vadd.xlane.f32.xlu0 %v154
      %v156 = vpop.xlane.xlu0 %155
      %v157 = vsel %vm141, %v138, 0.0
      %158 = vadd.xlane.f32.xlu0 %v157
      %v159 = vpop.xlane.xlu0 %158
      %v160 = vsel %vm141, %v139, 0.0
      %161 = vadd.xlane.f32.xlu0 %v160
      %v162 = vpop.xlane.xlu0 %161
      %v163 = vsel %vm141, %v140, 0.0
      %164 = vadd.xlane.f32.xlu0 %v163
      %v165 = vpop.xlane.xlu0 %164
      %vm166 = vcmask 7168
      %167 = vst.msk [vmem:[%s118] sm:$0xff] %vm166, %v144
      %168 = vst.msk [vmem:[%s118 + $0x8] sm:$0xff] %vm166, %v147
      %169 = vst.msk [vmem:[%s118 + $0x10] sm:$0xff] %vm166, %v150
      %170 = vst.msk [vmem:[%s118 + $0x18] sm:$0xff] %vm166, %v153
      %171 = vst.msk [vmem:[%s118 + $0x20] sm:$0xff] %vm166, %v156
      %172 = vst.msk [vmem:[%s118 + $0x28] sm:$0xff] %vm166, %v159
      %173 = vst.msk [vmem:[%s118 + $0x30] sm:$0xff] %vm166, %v162
      %174 = vst.msk [vmem:[%s118 + $0x38] sm:$0xff] %vm166, %v165
      %s175 = smul.u32 8, %s12
      %p176 = scmp.lt.s32.totalorder %s175, 63
      %s177 = scalar_select %p176, %s175, 63
      %s178 = smul.addr %s177, 8
      %s179 = scalar_lea.vmem %s1, %s178
      // Predicated region
      $region25: #{tpu_custom_call.1} parent=23 // pred_check
        %p180 = pneg %p56
      $region26: #{tpu_custom_call.1} parent=23 // pred_check_branch
        %182 = sbr.rel (%p180) target = $region28
      $region27: #{tpu_custom_call.1} parent=23 // pred_region
        %s183 = smul.u32 8, %s12
      $region28: #{tpu_custom_call.1} parent=23 // pred_fallthru
        _
    $region24: #{tpu_custom_call.1} parent=5 // pred_fallthru
      _
    %p184 = scmp.le.s32.totalorder 2, %s7
    // Predicated region
    $region29: #{tpu_custom_call.1} parent=5 // pred_check
      %p185 = pneg %p184
    $region30: #{tpu_custom_call.1} parent=5 // pred_check_branch
      %187 = sbr.rel (%p185) target = $region32
    $region31: #{tpu_custom_call.1} parent=5 // pred_region
      %s188 = ssub.s32 %s7, 2
      // Predicated region
      $region33: #{tpu_custom_call.1} parent=31 // pred_check
        %p189 = pneg %p62
      $region34: #{tpu_custom_call.1} parent=31 // pred_check_branch
        %191 = sbr.rel (%p189) target = $region36
      $region35: #{tpu_custom_call.1} parent=31 // pred_region
        %s192 = smul.u32 8, %s13
        %p193 = scmp.lt.s32.totalorder %s192, 63
        %s194 = scalar_select %p193, %s192, 63
        %s195 = smul.addr %s194, 8
        %s196 = scalar_lea.vmem %s1, %s195
      $region36: #{tpu_custom_call.1} parent=31 // pred_fallthru
        _
    $region32: #{tpu_custom_call.1} parent=5 // pred_fallthru
      _
  $region6: #{tpu_custom_call.1} parent=0 // loop_footer
    %s11 = sadd.s32 1, %s7
  $region7: #{tpu_custom_call.1} parent=0 // loop_footer_branch
    %6 = sbr.rel target = $region3
  $region8: #{tpu_custom_call.1} parent=0 // loop_exit
    _

</llo_original>
